<compile_context>
chip_gen: v7x
topology: tpu7x:2x2x1
jax: 0.10.0
libtpu: 0.0.40
codegen_flags: <defaults>
</compile_context>

<pallas_src>
import functools

import jax
import jax.numpy as jnp
from jax import lax
from jax.experimental import pallas as pl
from jax.experimental.pallas import tpu as pltpu

_MIB = 1024 * 1024


def _round_up(x, m):
    return (x + m - 1) // m * m


def _device_kind():
    try:
        return jax.devices()[0].device_kind.lower()
    except Exception:  # pragma: no cover
        return ""


def _soft_loss_kernel(logits_ref, packed_ref, num_ref, *, num_cand,
                      unique_idxs, per_k_reduce, compute_dtype):
    """One grid step processes a (tile_rows, V) slab of rows.

    num_ref is a per-core (tile_rows, 1) f32 accumulator block whose block
    index is constant along the reduction ('arbitrary') axis, so it stays
    resident in VMEM across steps: init at step 0, accumulate afterwards.
    """
    step = pl.program_id(1)

    @pl.when(step == 0)
    def _():
        num_ref[...] = jnp.zeros_like(num_ref)

    logits = logits_ref[...]                                   # (TR, V) HBM dtype
    packed = packed_ref[...]                                   # (TR, 2K) int32
    idxs = packed[:, :num_cand]                                # (TR, K) int32
    probs = pltpu.bitcast(packed[:, num_cand:], jnp.float32)   # (TR, K) masked f32

    tr, v = logits.shape
    # Hoisted once per step; the per-k (TR,1) operands below broadcast against
    # it as stride-0 lane splats (no materialized (TR,V) temporaries).
    iota_v = lax.broadcasted_iota(jnp.int32, (tr, v), 1)

    if per_k_reduce:
        # v5e formulation: ~2 VALU passes per k (cmp + select) and the K lane
        # reductions go to the XLU (3 XLUs with slack; no bf16 VPU on v5e).
        logits_f = logits.astype(jnp.float32)
        row_dot = jnp.zeros((tr, 1), jnp.float32)
        for k in range(num_cand):                              # static small K
            hit = jnp.where(iota_v == idxs[:, k:k + 1], logits_f,
                            jnp.float32(0.0))
            row_dot = row_dot + probs[:, k:k + 1] * jnp.sum(
                hit, axis=-1, keepdims=True)
    else:
        # v6e/v7x formulation: fused weight tile -> one full-width multiply
        # and ONE cross-lane reduction per step.  compute_dtype is bf16 when
        # the logits stream is bf16 (VPU packs 2/word); overwrite-select when
        # idxs are unique within a row, duplicate-safe add form otherwise.
        logits_c = logits.astype(compute_dtype)
        w = jnp.zeros((tr, v), dtype=compute_dtype)
        zero = jnp.zeros((), dtype=compute_dtype)
        for k in range(num_cand):                              # static small K
            p_k = probs[:, k:k + 1].astype(compute_dtype)
            eq = iota_v == idxs[:, k:k + 1]
            if unique_idxs:
                w = jnp.where(eq, p_k, w)
            else:
                w = w + jnp.where(eq, p_k, zero)
        row_dot = jnp.sum((logits_c * w).astype(jnp.float32),
                          axis=-1, keepdims=True)

    # Reference numerator is -sum(soft_target * mask * gathered); mask is
    # already folded into probs, so just subtract the row dot products.
    num_ref[...] -= row_dot


def soft_loss_pallas(logits, idxs, soft_target, mask, *, soft_loss=1.0,
                     unique_idxs=True, tile_rows=None, num_cores=None,
                     per_k_reduce=None, vmem_budget_bytes=None,
                     vmem_limit_bytes=None):
    """SoftLoss forward.

    logits: [B,T,V] (f32 or bf16), idxs: [B,T,K] int, soft_target: [B,T,K],
    mask: [B,T].  Returns soft_loss * sum(soft_target * (-gathered) *
    mask[...,None]) / sum(mask).  Division by sum(mask) has no zero guard, to
    match the reference (an all-zero mask yields inf/nan by design).

    unique_idxs=True assumes idxs are unique within each row (the real
    top-k-candidate use case) and enables the cheaper overwrite-select weight
    build; pass False for exact duplicate-safe gather-then-sum semantics.
    """
    B, T, V = logits.shape
    K = idxs.shape[-1]
    N = B * T

    kind = _device_kind()
    is_v7 = ("v7" in kind) or ("tpu7" in kind)
    is_v5e = ("v5 lite" in kind) or ("v5e" in kind) or ("v5lite" in kind)

    if num_cores is None:
        # Grid-axis-0 parallelism only pays on 2-TensorCore chips (v4/v5p/v7x);
        # on single-TC v5e/v6e it just adds padding + grid-step overhead.
        num_cores = 2 if (is_v7 or "v4" in kind or "v5p" in kind) else 1
    if per_k_reduce is None:
        per_k_reduce = is_v5e
    if vmem_budget_bytes is None:
        vmem_budget_bytes = 20 * _MIB if is_v7 else 48 * _MIB
    if vmem_limit_bytes is None:
        vmem_limit_bytes = 40 * _MIB if is_v7 else 96 * _MIB

    # bf16 weight/product math only where the VPU packs bf16 (v6e/v7x).
    if logits.dtype == jnp.bfloat16 and not is_v5e:
        compute_dtype = jnp.bfloat16
    else:
        compute_dtype = jnp.float32

    # ---- flatten + fold mask into the soft targets --------------------------
    logits2 = logits.reshape(N, V)            # keep HBM dtype (bf16 stays bf16)
    mask2 = mask.reshape(N, 1).astype(jnp.float32)
    probs2 = soft_target.reshape(N, K).astype(jnp.float32) * mask2
    idxs2 = idxs.reshape(N, K).astype(jnp.int32)
    # One packed side input (idxs | probs-bits) -> a single narrow DMA per step.
    packed2 = jnp.concatenate(
        [idxs2, lax.bitcast_convert_type(probs2, jnp.int32)], axis=-1)  # (N, 2K)

    # ---- row tile from the (generation-dependent) VMEM budget ---------------
    itemsize = jnp.dtype(logits2.dtype).itemsize
    lane_v = _round_up(V, 128)
    # Double-buffered logits DMA block + ~8 B/elem of fused compute temporaries.
    bytes_per_row = lane_v * (2 * itemsize + 8)
    if tile_rows is None:
        tile_rows = int(vmem_budget_bytes // max(bytes_per_row, 1))
        tile_rows = max(16, min(1024, (tile_rows // 16) * 16))
    tile_rows = min(tile_rows, _round_up(pl.cdiv(N, num_cores), 16))
    tile_rows = max(16, (tile_rows // 16) * 16)

    rows_per_core = _round_up(pl.cdiv(N, num_cores), tile_rows)
    steps_per_core = rows_per_core // tile_rows
    n_pad = num_cores * rows_per_core
    if n_pad != N:
        pad = n_pad - N
        # Zero rows (probs already masked to 0) contribute nothing.
        logits2 = jnp.pad(logits2, ((0, pad), (0, 0)))
        packed2 = jnp.pad(packed2, ((0, pad), (0, 0)))

    row_block = lambda c, i: (c * steps_per_core + i, 0)   # noqa: E731
    kernel = functools.partial(
        _soft_loss_kernel, num_cand=K, unique_idxs=unique_idxs,
        per_k_reduce=per_k_reduce, compute_dtype=compute_dtype)

    num_out = pl.pallas_call(
        kernel,
        out_shape=jax.ShapeDtypeStruct((num_cores * tile_rows, 1), jnp.float32),
        grid_spec=pltpu.PrefetchScalarGridSpec(
            num_scalar_prefetch=0,
            grid=(num_cores, steps_per_core),
            in_specs=[
                pl.BlockSpec((tile_rows, V), row_block),       # logits stream
                pl.BlockSpec((tile_rows, 2 * K), row_block),   # idxs|probs packed
            ],
            out_specs=pl.BlockSpec((tile_rows, 1), lambda c, i: (c, 0)),
        ),
        compiler_params=pltpu.CompilerParams(
            dimension_semantics=("parallel", "arbitrary"),
            vmem_limit_bytes=vmem_limit_bytes,
        ),
    )(logits2, packed2)

    # Final scalar reductions in plain JAX; denominator mirrors the reference
    # (no zero guard).
    loss = jnp.sum(num_out) / jnp.sum(mask.astype(jnp.float32))
    return jnp.float32(soft_loss) * loss


def soft_loss_ref(logits, idxs, soft_target, mask, *, soft_loss=1.0):
    gathered = jnp.take_along_axis(logits, idxs, axis=-1)          # [B,T,K]
    topk = -1.0 * gathered * mask[..., None]
    output = soft_target * topk
    loss = jnp.sum(output) / jnp.sum(mask)
    return soft_loss * loss


if __name__ == "__main__":
    key = jax.random.PRNGKey(0)
    B, T, V, K = 2, 8, 128, 8          # batch, seq, vocab, top-k candidates
    SOFT_LOSS_WEIGHT = 0.5             # cfg.LOSSES.SOFT (deterministic, in-script)

    k1, k2, k3, k4, k5 = jax.random.split(key, 5)
    logits = jax.random.normal(k1, (B, T, V), dtype=jnp.float32)
    # VOCAB_IDS are top-k candidate ids -> unique within each row by construction.
    _, idxs = lax.top_k(jax.random.uniform(k2, (B, T, V)), K)
    idxs = idxs.astype(jnp.int32)
    soft_target = jax.nn.softmax(jax.random.normal(k3, (B, T, K)), axis=-1)
    mask = (jax.random.uniform(k4, (B, T)) > 0.3).astype(jnp.float32)
    mask = mask.at[0, 0].set(1.0)      # guard all-zero mask in the toy example

    # 1) f32 logits, unique idxs, default (device-tuned) path.
    out = soft_loss_pallas(logits, idxs, soft_target, mask,
                           soft_loss=SOFT_LOSS_WEIGHT)
    out = jax.block_until_ready(out)
    ref = soft_loss_ref(logits, idxs, soft_target, mask,
                        soft_loss=SOFT_LOSS_WEIGHT)
    assert jnp.allclose(out, ref, rtol=1e-5, atol=1e-5), (out, ref)

    # 2) bf16 logits path (halves HBM bytes; bf16 weight math on v6e/v7x).
    logits_bf16 = logits.astype(jnp.bfloat16)
    out_bf = soft_loss_pallas(logits_bf16, idxs, soft_target, mask,
                              soft_loss=SOFT_LOSS_WEIGHT)
    out_bf = jax.block_until_ready(out_bf)
    ref_bf = soft_loss_ref(logits_bf16.astype(jnp.float32), idxs, soft_target,
                           mask, soft_loss=SOFT_LOSS_WEIGHT)
    assert jnp.allclose(out_bf, ref_bf, rtol=2e-2, atol=3e-2), (out_bf, ref_bf)

    # 3) duplicate-safe mode (random idxs may repeat within a row).
    idxs_dup = jax.random.randint(k5, (B, T, K), 0, V, dtype=jnp.int32)
    out_dup = soft_loss_pallas(logits, idxs_dup, soft_target, mask,
                               soft_loss=SOFT_LOSS_WEIGHT, unique_idxs=False)
    out_dup = jax.block_until_ready(out_dup)
    ref_dup = soft_loss_ref(logits, idxs_dup, soft_target, mask,
                            soft_loss=SOFT_LOSS_WEIGHT)
    assert jnp.allclose(out_dup, ref_dup, rtol=1e-5, atol=1e-5), (out_dup, ref_dup)

    # 4) explicit v5e-style per-k XLU-reduction path (valid on any chip).
    out_xlu = soft_loss_pallas(logits, idxs, soft_target, mask,
                               soft_loss=SOFT_LOSS_WEIGHT, per_k_reduce=True)
    out_xlu = jax.block_until_ready(out_xlu)
    assert jnp.allclose(out_xlu, ref, rtol=1e-5, atol=1e-5), (out_xlu, ref)

    print("KERNEL_OK")
</pallas_src>

<mosaic_0001>
module attributes {stable_mosaic.version = 11 : i64} {
  func.func @_soft_loss_kernel(%arg0: i32, %arg1: i32, %arg2: memref<16x128xf32, #tpu.memory_space<vmem>>, %arg3: memref<16x16xi32, #tpu.memory_space<vmem>>, %arg4: memref<16x1xf32, #tpu.memory_space<vmem>>) attributes {dimension_semantics = [#tpu.dimension_semantics<parallel>, #tpu.dimension_semantics<arbitrary>], iteration_bounds = array<i64: 1, 1>, scalar_prefetch = 0 : i64, scratch_operands = 0 : i64, tpu.core_type = #tpu.core_type<tc>, window_params = [{transform_indices = @transform_0, window_bounds = array<i64: 16, 128>}, {transform_indices = @transform_1, window_bounds = array<i64: 16, 16>}, {transform_indices = @transform_2, window_bounds = array<i64: 16, 1>}]} {
    %c0_i32 = arith.constant 0 : i32
    %0 = arith.cmpi eq, %arg1, %c0_i32 : i32
    %1 = arith.extui %0 : i1 to i32
    %c0_i32_0 = arith.constant 0 : i32
    %2 = arith.cmpi ne, %1, %c0_i32_0 : i32
    scf.if %2 {
      %cst_9 = arith.constant 0.000000e+00 : f32
      %72 = vector.broadcast %cst_9 : f32 to vector<16x1xf32>
      %c0_10 = arith.constant 0 : index
      %c0_11 = arith.constant 0 : index
      %73 = vector.load %arg4[%c0_10, %c0_11] : memref<16x1xf32, #tpu.memory_space<vmem>>, vector<16x1xf32>
      tpu.vector_store %arg4[%c0_10, %c0_11], %72 {strides = array<i32>} : memref<16x1xf32, #tpu.memory_space<vmem>>, vector<16x1xf32>,
    } else {
    }
    %c0 = arith.constant 0 : index
    %c0_1 = arith.constant 0 : index
    %3 = vector.load %arg2[%c0, %c0_1] : memref<16x128xf32, #tpu.memory_space<vmem>>, vector<16x128xf32>
    %c0_2 = arith.constant 0 : index
    %c0_3 = arith.constant 0 : index
    %4 = vector.load %arg3[%c0_2, %c0_3] : memref<16x16xi32, #tpu.memory_space<vmem>>, vector<16x16xi32>
    %5 = vector.extract_strided_slice %4 {offsets = [0, 0], sizes = [16, 8], strides = [1, 1]} : vector<16x16xi32> to vector<16x8xi32>
    %6 = vector.extract_strided_slice %4 {offsets = [0, 8], sizes = [16, 8], strides = [1, 1]} : vector<16x16xi32> to vector<16x8xi32>
    %7 = tpu.bitcast %6 : vector<16x8xi32> -> vector<16x8xf32>
    %8 = tpu.iota {dimensions = array<i32: 1>} : vector<16x128xi32>
    %cst = arith.constant 0.000000e+00 : f32
    %9 = vector.broadcast %cst : f32 to vector<16x128xf32>
    %10 = vector.extract_strided_slice %7 {offsets = [0, 0], sizes = [16, 1], strides = [1, 1]} : vector<16x8xf32> to vector<16x1xf32>
    %11 = vector.extract_strided_slice %5 {offsets = [0, 0], sizes = [16, 1], strides = [1, 1]} : vector<16x8xi32> to vector<16x1xi32>
    %12 = vector.broadcast %11 : vector<16x1xi32> to vector<16x128xi32>
    %13 = arith.cmpi eq, %8, %12 : vector<16x128xi32>
    %14 = vector.shape_cast %10 : vector<16x1xf32> to vector<16x1xf32>
    %15 = vector.broadcast %14 : vector<16x1xf32> to vector<16x128xf32>
    %16 = arith.select %13, %15, %9 : vector<16x128xi1>, vector<16x128xf32>
    %17 = vector.extract_strided_slice %7 {offsets = [0, 1], sizes = [16, 1], strides = [1, 1]} : vector<16x8xf32> to vector<16x1xf32>
    %18 = vector.extract_strided_slice %5 {offsets = [0, 1], sizes = [16, 1], strides = [1, 1]} : vector<16x8xi32> to vector<16x1xi32>
    %19 = vector.broadcast %18 : vector<16x1xi32> to vector<16x128xi32>
    %20 = arith.cmpi eq, %8, %19 : vector<16x128xi32>
    %21 = vector.shape_cast %17 : vector<16x1xf32> to vector<16x1xf32>
    %22 = vector.broadcast %21 : vector<16x1xf32> to vector<16x128xf32>
    %23 = arith.select %20, %22, %16 : vector<16x128xi1>, vector<16x128xf32>
    %24 = vector.extract_strided_slice %7 {offsets = [0, 2], sizes = [16, 1], strides = [1, 1]} : vector<16x8xf32> to vector<16x1xf32>
    %25 = vector.extract_strided_slice %5 {offsets = [0, 2], sizes = [16, 1], strides = [1, 1]} : vector<16x8xi32> to vector<16x1xi32>
    %26 = vector.broadcast %25 : vector<16x1xi32> to vector<16x128xi32>
    %27 = arith.cmpi eq, %8, %26 : vector<16x128xi32>
    %28 = vector.shape_cast %24 : vector<16x1xf32> to vector<16x1xf32>
    %29 = vector.broadcast %28 : vector<16x1xf32> to vector<16x128xf32>
    %30 = arith.select %27, %29, %23 : vector<16x128xi1>, vector<16x128xf32>
    %31 = vector.extract_strided_slice %7 {offsets = [0, 3], sizes = [16, 1], strides = [1, 1]} : vector<16x8xf32> to vector<16x1xf32>
    %32 = vector.extract_strided_slice %5 {offsets = [0, 3], sizes = [16, 1], strides = [1, 1]} : vector<16x8xi32> to vector<16x1xi32>
    %33 = vector.broadcast %32 : vector<16x1xi32> to vector<16x128xi32>
    %34 = arith.cmpi eq, %8, %33 : vector<16x128xi32>
    %35 = vector.shape_cast %31 : vector<16x1xf32> to vector<16x1xf32>
    %36 = vector.broadcast %35 : vector<16x1xf32> to vector<16x128xf32>
    %37 = arith.select %34, %36, %30 : vector<16x128xi1>, vector<16x128xf32>
    %38 = vector.extract_strided_slice %7 {offsets = [0, 4], sizes = [16, 1], strides = [1, 1]} : vector<16x8xf32> to vector<16x1xf32>
    %39 = vector.extract_strided_slice %5 {offsets = [0, 4], sizes = [16, 1], strides = [1, 1]} : vector<16x8xi32> to vector<16x1xi32>
    %40 = vector.broadcast %39 : vector<16x1xi32> to vector<16x128xi32>
    %41 = arith.cmpi eq, %8, %40 : vector<16x128xi32>
    %42 = vector.shape_cast %38 : vector<16x1xf32> to vector<16x1xf32>
    %43 = vector.broadcast %42 : vector<16x1xf32> to vector<16x128xf32>
    %44 = arith.select %41, %43, %37 : vector<16x128xi1>, vector<16x128xf32>
    %45 = vector.extract_strided_slice %7 {offsets = [0, 5], sizes = [16, 1], strides = [1, 1]} : vector<16x8xf32> to vector<16x1xf32>
    %46 = vector.extract_strided_slice %5 {offsets = [0, 5], sizes = [16, 1], strides = [1, 1]} : vector<16x8xi32> to vector<16x1xi32>
    %47 = vector.broadcast %46 : vector<16x1xi32> to vector<16x128xi32>
    %48 = arith.cmpi eq, %8, %47 : vector<16x128xi32>
    %49 = vector.shape_cast %45 : vector<16x1xf32> to vector<16x1xf32>
    %50 = vector.broadcast %49 : vector<16x1xf32> to vector<16x128xf32>
    %51 = arith.select %48, %50, %44 : vector<16x128xi1>, vector<16x128xf32>
    %52 = vector.extract_strided_slice %7 {offsets = [0, 6], sizes = [16, 1], strides = [1, 1]} : vector<16x8xf32> to vector<16x1xf32>
    %53 = vector.extract_strided_slice %5 {offsets = [0, 6], sizes = [16, 1], strides = [1, 1]} : vector<16x8xi32> to vector<16x1xi32>
    %54 = vector.broadcast %53 : vector<16x1xi32> to vector<16x128xi32>
    %55 = arith.cmpi eq, %8, %54 : vector<16x128xi32>
    %56 = vector.shape_cast %52 : vector<16x1xf32> to vector<16x1xf32>
    %57 = vector.broadcast %56 : vector<16x1xf32> to vector<16x128xf32>
    %58 = arith.select %55, %57, %51 : vector<16x128xi1>, vector<16x128xf32>
    %59 = vector.extract_strided_slice %7 {offsets = [0, 7], sizes = [16, 1], strides = [1, 1]} : vector<16x8xf32> to vector<16x1xf32>
    %60 = vector.extract_strided_slice %5 {offsets = [0, 7], sizes = [16, 1], strides = [1, 1]} : vector<16x8xi32> to vector<16x1xi32>
    %61 = vector.broadcast %60 : vector<16x1xi32> to vector<16x128xi32>
    %62 = arith.cmpi eq, %8, %61 : vector<16x128xi32>
    %63 = vector.shape_cast %59 : vector<16x1xf32> to vector<16x1xf32>
    %64 = vector.broadcast %63 : vector<16x1xf32> to vector<16x128xf32>
    %65 = arith.select %62, %64, %58 : vector<16x128xi1>, vector<16x128xf32>
    %66 = arith.mulf %3, %65 : vector<16x128xf32>
    %cst_4 = arith.constant dense<0.000000e+00> : vector<16xf32>
    %67 = vector.multi_reduction <add>, %66, %cst_4 [1] : vector<16x128xf32> to vector<16xf32>
    %68 = vector.shape_cast %67 : vector<16xf32> to vector<16x1xf32>
    %c0_5 = arith.constant 0 : index
    %c0_6 = arith.constant 0 : index
    %69 = vector.load %arg4[%c0_5, %c0_6] : memref<16x1xf32, #tpu.memory_space<vmem>>, vector<16x1xf32>
    %70 = arith.subf %69, %68 : vector<16x1xf32>
    %c0_7 = arith.constant 0 : index
    %c0_8 = arith.constant 0 : index
    %71 = vector.load %arg4[%c0_7, %c0_8] : memref<16x1xf32, #tpu.memory_space<vmem>>, vector<16x1xf32>
    tpu.vector_store %arg4[%c0_7, %c0_8], %70 {strides = array<i32>} : memref<16x1xf32, #tpu.memory_space<vmem>>, vector<16x1xf32>,
    return
  }
  func.func @transform_0(%arg0: i32, %arg1: i32) -> (i32, i32) {
    %c1_i32 = arith.constant 1 : i32
    %0 = arith.muli %arg0, %c1_i32 : i32
    %1 = arith.addi %0, %arg1 : i32
    %c0_i32 = arith.constant 0 : i32
    %c0_i32_0 = arith.constant 0 : i32
    return %1, %c0_i32 : i32, i32
  }
  func.func @transform_1(%arg0: i32, %arg1: i32) -> (i32, i32) {
    %c1_i32 = arith.constant 1 : i32
    %0 = arith.muli %arg0, %c1_i32 : i32
    %1 = arith.addi %0, %arg1 : i32
    %c0_i32 = arith.constant 0 : i32
    %c0_i32_0 = arith.constant 0 : i32
    return %1, %c0_i32 : i32, i32
  }
  func.func @transform_2(%arg0: i32, %arg1: i32) -> (i32, i32) {
    %c0_i32 = arith.constant 0 : i32
    %c0_i32_0 = arith.constant 0 : i32
    return %arg0, %c0_i32 : i32, i32
  }
}

</mosaic_0001>

<llo_original>
// kernel: tpu_custom_call.1
$region0: #{tpu_custom_call.1}
  #allocation0 [shape = 'u32[]', space=smem, size = 0x4, offset = 0x4, fixed_abs, tag = 'smem constant byte address 0x4 - core index']
  #allocation1 [shape = 'u32[144,128]{1,0:T(1,128)}', space=vmem, size = 0x12000, scoped, tag = 'internal scratch']
  %s0 = inlined_call_operand.hbm [shape: f32[16,128], index: 0, kind: input, shape index: {}]
  %s1 = inlined_call_operand.hbm [shape: s32[16,16], index: 1, kind: input, shape index: {}]
  %s2 = inlined_call_operand.hbm [shape: f32[16,1], index: 2, kind: output, shape index: {}]
  %s3 = sld [smem:[#allocation0]]
  $region30: #{tpu_custom_call.1} parent=0
    _
  %s5 = ssub.s32 1, %s3
  %s6 = scalar_select 0, %s5, %s3
  $region1: #{tpu_custom_call.1} parent=0
    #allocation2 [shape = 'u8[8192]{0}', space=vmem, size = 0x2000, scoped, tag = 'input window, operand 0, single buffered']
    #allocation3 [shape = 's32[1]{0}', space=sflag, size = 0x4, scoped, tag = 'scoped memory for tpu_custom_call.1']
    #allocation4 [shape = 's32[1]{0}', space=sflag, size = 0x4, scoped, tag = 'scoped memory for tpu_custom_call.1']
    #allocation5 [shape = 'u8[8192]{0}', space=vmem, size = 0x2000, scoped, tag = 'input window, operand 1, single buffered']
    #allocation6 [shape = 's32[1]{0}', space=sflag, size = 0x4, scoped, tag = 'scoped memory for tpu_custom_call.1']
    #allocation7 [shape = 'u8[8192]{0}', space=vmem, size = 0x2000, scoped, tag = 'output window, operand 0, single buffered']
    %7 = vsyncpa [#allocation3], 0
    %8 = vsyncpa [#allocation6], 0
    %9 = vsyncpa [#allocation4], 0
    // Predicated region
    $region2: #{tpu_custom_call.1} parent=1 // pred_check
      _
    $region3: #{tpu_custom_call.1} parent=1 // pred_check_branch
      %11 = sbr.rel (0) target = $region5
    $region4: #{tpu_custom_call.1} parent=1 // pred_region
      %s12 = sadd.s32 0, 0
      %s13 = smul.u32 2, %s12
      %s15 = ssub.s32 256, 256
      %16 = vsyncadd [#allocation3], %s15
      %s17 = smul.addr %s13, 128
      %s18 = scalar_lea.hbm %s0, %s17
      %s19 = sshll.u32 [#allocation2], 4
      %s20 = int_to_ptr.vmem [resolvable:$true] %s19
      %25 = dma.hbm_to_vmem [thread:$0]  %s18, 256, %s20, [#allocation3], 128, 128, 8
    $region5: #{tpu_custom_call.1} parent=1 // pred_fallthru
      _
    // Predicated region
    $region6: #{tpu_custom_call.1} parent=1 // pred_check
      _
    $region7: #{tpu_custom_call.1} parent=1 // pred_check_branch
      %27 = sbr.rel (0) target = $region9
    $region8: #{tpu_custom_call.1} parent=1 // pred_region
      %s28 = sadd.s32 0, 0
      %s29 = smul.u32 2, %s28
      %s31 = ssub.s32 256, 256
      %32 = vsyncadd [#allocation6], %s31
      %s33 = smul.addr %s29, 128
      %s34 = scalar_lea.hbm %s1, %s33
      %s35 = sshll.u32 [#allocation5], 4
      %s36 = int_to_ptr.vmem [resolvable:$true] %s35
      %41 = dma.hbm_to_vmem [thread:$0]  %s34, 256, %s36, [#allocation6], 128, 128, 8
    $region9: #{tpu_custom_call.1} parent=1 // pred_fallthru
      _
    // Predicated region
    $region10: #{tpu_custom_call.1} parent=1 // pred_check
      _
    $region11: #{tpu_custom_call.1} parent=1 // pred_check_branch
      %43 = sbr.rel (0) target = $region13
    $region12: #{tpu_custom_call.1} parent=1 // pred_region
      %44 = dma.done [#allocation3], 256
    $region13: #{tpu_custom_call.1} parent=1 // pred_fallthru
      _
    // Predicated region
    $region14: #{tpu_custom_call.1} parent=1 // pred_check
      _
    $region15: #{tpu_custom_call.1} parent=1 // pred_check_branch
      %46 = sbr.rel (0) target = $region17
    $region16: #{tpu_custom_call.1} parent=1 // pred_region
      %47 = dma.done [#allocation6], 256
    $region17: #{tpu_custom_call.1} parent=1 // pred_fallthru
      _
    %s48 = sadd.s32 0, 0
    %s49 = smul.u32 2, %s48
    %s50 = sadd.s32 0, 0
    %s51 = smul.u32 2, %s50
    %p52 = scmp.eq.s32.totalorder 0, 0
    // Predicated region
    $region18: #{tpu_custom_call.1} parent=1 // pred_check
      %p53 = pneg %p52
    $region19: #{tpu_custom_call.1} parent=1 // pred_check_branch
      %55 = sbr.rel (%p53) target = $region21
    $region20: #{tpu_custom_call.1} parent=1 // pred_region
      %vm56 = vcmask 7168
      %57 = vst.msk [vmem:[#allocation7] sm:$0xff] %vm56, 0.0
      %58 = vst.msk [vmem:[#allocation7 + $0x8] sm:$0xff] %vm56, 0.0
    $region21: #{tpu_custom_call.1} parent=1 // pred_fallthru
      _
    %v59 = vld [vmem:[#allocation2] sm:$0xff]
    %v60 = vld [vmem:[#allocation2 + $0x8] sm:$0xff]
    %v61 = vld [vmem:[#allocation5] sm:$0xff]
    %v62 = vld [vmem:[#allocation5 + $0x8] sm:$0xff]
    %v63 = vlaneseq
    %v64 = vand.u32 %v63, 127
    %65 = vset.pattern.permute.xlu0 0
    %66 = vperm.xlu0 %65, %v61
    %v67 = vpop.permute.xlu0 %66
    %68 = vset.pattern.permute.xlu0 0
    %69 = vperm.xlu0 %68, %v62
    %v70 = vpop.permute.xlu0 %69
    %vm71 = vcmp.eq.s32.totalorder %v64, %v67
    %vm72 = vcmp.eq.s32.totalorder %v64, %v70
    %73 = vset.pattern.permute.xlu0 8
    %74 = vperm.xlu0 %73, %v61
    %v75 = vpop.permute.xlu0 %74
    %77 = vset.pattern.permute.xlu0 8
    %78 = vperm.xlu0 %77, %v62
    %v79 = vpop.permute.xlu0 %78
    %v81 = vsel %vm71, %v75, 0.0
    %v82 = vsel %vm72, %v79, 0.0
    %83 = vset.pattern.permute.xlu0 1
    %84 = vperm.xlu0 %83, %v61
    %v85 = vpop.permute.xlu0 %84
    %86 = vset.pattern.permute.xlu0 1
    %87 = vperm.xlu0 %86, %v62
    %v88 = vpop.permute.xlu0 %87
    %vm89 = vcmp.eq.s32.totalorder %v64, %v85
    %vm90 = vcmp.eq.s32.totalorder %v64, %v88
    %91 = vset.pattern.permute.xlu0 9
    %92 = vperm.xlu0 %91, %v61
    %v93 = vpop.permute.xlu0 %92
    %95 = vset.pattern.permute.xlu0 9
    %96 = vperm.xlu0 %95, %v62
    %v97 = vpop.permute.xlu0 %96
    %v99 = vsel %vm89, %v93, %v81
    %v100 = vsel %vm90, %v97, %v82
    %101 = vset.pattern.permute.xlu0 2
    %102 = vperm.xlu0 %101, %v61
    %v103 = vpop.permute.xlu0 %102
    %104 = vset.pattern.permute.xlu0 2
    %105 = vperm.xlu0 %104, %v62
    %v106 = vpop.permute.xlu0 %105
    %vm107 = vcmp.eq.s32.totalorder %v64, %v103
    %vm108 = vcmp.eq.s32.totalorder %v64, %v106
    %109 = vset.pattern.permute.xlu0 10
    %110 = vperm.xlu0 %109, %v61
    %v111 = vpop.permute.xlu0 %110
    %113 = vset.pattern.permute.xlu0 10
    %114 = vperm.xlu0 %113, %v62
    %v115 = vpop.permute.xlu0 %114
    %v117 = vsel %vm107, %v111, %v99
    %v118 = vsel %vm108, %v115, %v100
    %119 = vset.pattern.permute.xlu0 3
    %120 = vperm.xlu0 %119, %v61
    %v121 = vpop.permute.xlu0 %120
    %122 = vset.pattern.permute.xlu0 3
    %123 = vperm.xlu0 %122, %v62
    %v124 = vpop.permute.xlu0 %123
    %vm125 = vcmp.eq.s32.totalorder %v64, %v121
    %vm126 = vcmp.eq.s32.totalorder %v64, %v124
    %127 = vset.pattern.permute.xlu0 11
    %128 = vperm.xlu0 %127, %v61
    %v129 = vpop.permute.xlu0 %128
    %131 = vset.pattern.permute.xlu0 11
    %132 = vperm.xlu0 %131, %v62
    %v133 = vpop.permute.xlu0 %132
    %v135 = vsel %vm125, %v129, %v117
    %v136 = vsel %vm126, %v133, %v118
    %137 = vset.pattern.permute.xlu0 4
    %138 = vperm.xlu0 %137, %v61
    %v139 = vpop.permute.xlu0 %138
    %140 = vset.pattern.permute.xlu0 4
    %141 = vperm.xlu0 %140, %v62
    %v142 = vpop.permute.xlu0 %141
    %vm143 = vcmp.eq.s32.totalorder %v64, %v139
    %vm144 = vcmp.eq.s32.totalorder %v64, %v142
    %145 = vset.pattern.permute.xlu0 12
    %146 = vperm.xlu0 %145, %v61
    %v147 = vpop.permute.xlu0 %146
    %149 = vset.pattern.permute.xlu0 12
    %150 = vperm.xlu0 %149, %v62
    %v151 = vpop.permute.xlu0 %150
    %v153 = vsel %vm143, %v147, %v135
    %v154 = vsel %vm144, %v151, %v136
    %155 = vset.pattern.permute.xlu0 5
    %156 = vperm.xlu0 %155, %v61
    %v157 = vpop.permute.xlu0 %156
    %158 = vset.pattern.permute.xlu0 5
    %159 = vperm.xlu0 %158, %v62
    %v160 = vpop.permute.xlu0 %159
    %vm161 = vcmp.eq.s32.totalorder %v64, %v157
    %vm162 = vcmp.eq.s32.totalorder %v64, %v160
    %163 = vset.pattern.permute.xlu0 13
    %164 = vperm.xlu0 %163, %v61
    %v165 = vpop.permute.xlu0 %164
    %167 = vset.pattern.permute.xlu0 13
    %168 = vperm.xlu0 %167, %v62
    %v169 = vpop.permute.xlu0 %168
    %v171 = vsel %vm161, %v165, %v153
    %v172 = vsel %vm162, %v169, %v154
    %173 = vset.pattern.permute.xlu0 6
    %174 = vperm.xlu0 %173, %v61
    %v175 = vpop.permute.xlu0 %174
    %176 = vset.pattern.permute.xlu0 6
    %177 = vperm.xlu0 %176, %v62
    %v178 = vpop.permute.xlu0 %177
    %vm179 = vcmp.eq.s32.totalorder %v64, %v175
    %vm180 = vcmp.eq.s32.totalorder %v64, %v178
    %181 = vset.pattern.permute.xlu0 14
    %182 = vperm.xlu0 %181, %v61
    %v183 = vpop.permute.xlu0 %182
    %185 = vset.pattern.permute.xlu0 14
    %186 = vperm.xlu0 %185, %v62
    %v187 = vpop.permute.xlu0 %186
    %v189 = vsel %vm179, %v183, %v171
    %v190 = vsel %vm180, %v187, %v172
    %191 = vset.pattern.permute.xlu0 7
    %192 = vperm.xlu0 %191, %v61
    %v193 = vpop.permute.xlu0 %192
    %194 = vset.pattern.permute.xlu0 7
    %195 = vperm.xlu0 %194, %v62
    %v196 = vpop.permute.xlu0 %195
    %vm197 = vcmp.eq.s32.totalorder %v64, %v193
    %vm198 = vcmp.eq.s32.totalorder %v64, %v196
    %199 = vset.pattern.permute.xlu0 15
    %200 = vperm.xlu0 %199, %v61
    %v201 = vpop.permute.xlu0 %200
    %203 = vset.pattern.permute.xlu0 15
    %204 = vperm.xlu0 %203, %v62
    %v205 = vpop.permute.xlu0 %204
    %v207 = vsel %vm197, %v201, %v189
    %v208 = vsel %vm198, %v205, %v190
    %v209 = vmul.f32 %v59, %v207
    %v210 = vmul.f32 %v60, %v208
    %211 = vadd.xlane.f32.xlu0 %v209
    %v212 = vpop.xlane.xlu0 %211
    %213 = vadd.xlane.f32.xlu0 %v210
    %v214 = vpop.xlane.xlu0 %213
    %v215 = vld [vmem:[#allocation7] sm:$0xff]
    %v216 = vld [vmem:[#allocation7 + $0x8] sm:$0xff]
    %v217 = vsub.f32 %v215, %v212
    %v218 = vsub.f32 %v216, %v214
    %vm219 = vcmask 7168
    %220 = vst.msk [vmem:[#allocation7] sm:$0xff] %vm219, %v217
    %221 = vst.msk [vmem:[#allocation7 + $0x8] sm:$0xff] %vm219, %v218
    // Predicated region
    $region22: #{tpu_custom_call.1} parent=1 // pred_check
      _
    $region23: #{tpu_custom_call.1} parent=1 // pred_check_branch
      %223 = sbr.rel (0) target = $region25
    $region24: #{tpu_custom_call.1} parent=1 // pred_region
      %s225 = ssub.s32 256, 256
      %226 = vsyncadd [#allocation4], %s225
      %s227 = sshll.u32 [#allocation7], 4
      %s228 = int_to_ptr.vmem [resolvable:$true] %s227
      %233 = dma.vmem_to_hbm [thread:$0]  %s228, 256, %s2, [#allocation4], 128, 128, 8
    $region25: #{tpu_custom_call.1} parent=1 // pred_fallthru
      _
    // Predicated region
    $region26: #{tpu_custom_call.1} parent=1 // pred_check
      _
    $region27: #{tpu_custom_call.1} parent=1 // pred_check_branch
      %235 = sbr.rel (0) target = $region29
    $region28: #{tpu_custom_call.1} parent=1 // pred_region
      %236 = dma.done [#allocation4], 256
    $region29: #{tpu_custom_call.1} parent=1 // pred_fallthru
      _
    %237 = vsyncpa [#allocation3], 1
    %238 = vsyncpa [#allocation6], 1
    %239 = vsyncpa [#allocation4], 1

</llo_original>
